<compile_context>
chip_gen: v7x
topology: tpu7x:2x2x1
jax: 0.10.0
libtpu: 0.0.40
codegen_flags: <defaults>
</compile_context>

<pallas_src>
import jax
import jax.numpy as jnp
from jax.experimental import pallas as pl
from jax.experimental.pallas import tpu as pltpu

_LANES = 512          # lane-dense last dim: large multiple of 128 -> unmasked vst
_MAX_ROW_TILE = 1024  # rows per grid step; 1024*512*4B = 2 MiB per buffer
_TINY_LANES = 128     # minimal lane width for the tiny-input path
_VMEM_LIMIT = 24 << 20  # explicit scoped-VMEM budget (covers v5e's 16 MiB default)


def _add_module3_kernel(x_ref, y_ref, xy_ref, xx_ref):
    # Elementwise on the VPU; binding resource is DMA, so keep this minimal.
    x = x_ref[...]
    xy_ref[...] = x + y_ref[...]
    xx_ref[...] = x + x


def _round_up(n: int, m: int) -> int:
    return ((n + m - 1) // m) * m


def _pallas_add(x2d: jax.Array, y2d: jax.Array, row_tile: int):
    """Run the elementwise kernel over a lane-dense 2-D slab."""
    rows, lanes = x2d.shape
    grid = (pl.cdiv(rows, row_tile),)
    spec = pl.BlockSpec((row_tile, lanes), lambda i: (i, 0))
    itemsize = jnp.dtype(x2d.dtype).itemsize
    cost = pl.CostEstimate(
        flops=2 * rows * lanes,
        transcendentals=0,
        bytes_accessed=4 * rows * lanes * itemsize,  # 2 reads + 2 writes
    )
    return pl.pallas_call(
        _add_module3_kernel,
        out_shape=(
            jax.ShapeDtypeStruct((rows, lanes), x2d.dtype),
            jax.ShapeDtypeStruct((rows, lanes), x2d.dtype),
        ),
        grid=grid,
        in_specs=[spec, spec],
        out_specs=(spec, spec),
        compiler_params=pltpu.CompilerParams(
            dimension_semantics=("parallel",),
            vmem_limit_bytes=_VMEM_LIMIT,
        ),
        cost_estimate=cost,
    )(x2d, y2d)


def add_module3(x: jax.Array, y: jax.Array):
    """Pallas implementation of AddModule3.forward(x, y) -> (x + y, x + x)."""
    assert x.shape == y.shape and x.dtype == y.dtype
    orig_shape = x.shape
    n = int(x.size)

    xf = x.reshape(-1)
    yf = y.reshape(-1)

    # ---- Tiny-input path: the whole problem fits one (8, 128) tile. ----
    if n <= 8 * _TINY_LANES:
        total = 8 * _TINY_LANES
        pad = total - n
        if pad:
            xf = jnp.pad(xf, (0, pad))
            yf = jnp.pad(yf, (0, pad))
        xy2d, xx2d = _pallas_add(
            xf.reshape(8, _TINY_LANES), yf.reshape(8, _TINY_LANES), row_tile=8
        )
        xy = xy2d.reshape(-1)[:n].reshape(orig_shape)
        xx = xx2d.reshape(-1)[:n].reshape(orig_shape)
        return xy, xx

    # ---- General path: lane-dense (rows, 512) slab, rows padded to 8 only. ----
    rows_needed = pl.cdiv(n, _LANES)
    rows_padded = _round_up(rows_needed, 8)
    total_padded = rows_padded * _LANES
    pad = total_padded - n

    if pad:
        xf = jnp.pad(xf, (0, pad))
        yf = jnp.pad(yf, (0, pad))
    x2d = xf.reshape(rows_padded, _LANES)
    y2d = yf.reshape(rows_padded, _LANES)

    row_tile = min(_MAX_ROW_TILE, rows_padded)
    if rows_padded > 8 and pl.cdiv(rows_padded, row_tile) < 2:
        # Ensure >= 2 grid steps so both v7x TensorCores share the bandwidth.
        row_tile = _round_up(pl.cdiv(rows_padded, 2), 8)

    xy2d, xx2d = _pallas_add(x2d, y2d, row_tile)

    if pad:
        xy = xy2d.reshape(-1)[:n].reshape(orig_shape)
        xx = xx2d.reshape(-1)[:n].reshape(orig_shape)
    else:
        xy = xy2d.reshape(orig_shape)
        xx = xx2d.reshape(orig_shape)
    return xy, xx


if __name__ == "__main__":
    key = jax.random.PRNGKey(0)
    kx, ky, kx2, ky2, kx3, ky3 = jax.random.split(key, 6)

    # Module's example_input shape: length-5 int32 vectors (tiny path, grid=(1,)).
    x = jax.random.randint(kx, (5,), minval=-100, maxval=100, dtype=jnp.int32)
    y = jax.random.randint(ky, (5,), minval=-100, maxval=100, dtype=jnp.int32)
    out_xy, out_xx = add_module3(x, y)
    jax.block_until_ready((out_xy, out_xx))
    assert out_xy.dtype == jnp.int32 and out_xx.dtype == jnp.int32
    assert out_xy.shape == x.shape and out_xx.shape == x.shape
    assert jnp.array_equal(out_xy, x + y)
    assert jnp.array_equal(out_xx, x + x)

    # Aligned size: no padding, direct reshape path, >= 2 grid steps.
    n_al = 8 * _LANES * 3
    xa = jax.random.randint(kx2, (n_al,), minval=-1000, maxval=1000, dtype=jnp.int32)
    ya = jax.random.randint(ky2, (n_al,), minval=-1000, maxval=1000, dtype=jnp.int32)
    al_xy, al_xx = add_module3(xa, ya)
    jax.block_until_ready((al_xy, al_xx))
    assert jnp.array_equal(al_xy, xa + ya)
    assert jnp.array_equal(al_xx, xa + xa)

    # Non-aligned size: tail-only padding + partial (masked) last block.
    n_big = 3 * 4096 + 7
    xb = jax.random.randint(kx3, (n_big,), minval=-1000, maxval=1000, dtype=jnp.int32)
    yb = jax.random.randint(ky3, (n_big,), minval=-1000, maxval=1000, dtype=jnp.int32)
    big_xy, big_xx = add_module3(xb, yb)
    jax.block_until_ready((big_xy, big_xx))
    assert jnp.array_equal(big_xy, xb + yb)
    assert jnp.array_equal(big_xx, xb + xb)

    print("KERNEL_OK")
</pallas_src>

<mosaic_0001>
module attributes {stable_mosaic.version = 11 : i64} {
  func.func @_add_module3_kernel(%arg0: i32, %arg1: memref<8x128xi32, #tpu.memory_space<vmem>>, %arg2: memref<8x128xi32, #tpu.memory_space<vmem>>, %arg3: memref<8x128xi32, #tpu.memory_space<vmem>>, %arg4: memref<8x128xi32, #tpu.memory_space<vmem>>) attributes {dimension_semantics = [#tpu.dimension_semantics<parallel>], iteration_bounds = array<i64: 1>, scalar_prefetch = 0 : i64, scratch_operands = 0 : i64, tpu.core_type = #tpu.core_type<tc>, window_params = [{transform_indices = @transform_0, window_bounds = array<i64: 8, 128>}, {transform_indices = @transform_1, window_bounds = array<i64: 8, 128>}, {transform_indices = @transform_2, window_bounds = array<i64: 8, 128>}, {transform_indices = @transform_3, window_bounds = array<i64: 8, 128>}]} {
    %c0 = arith.constant 0 : index
    %c0_0 = arith.constant 0 : index
    %0 = vector.load %arg1[%c0, %c0_0] : memref<8x128xi32, #tpu.memory_space<vmem>>, vector<8x128xi32>
    %c0_1 = arith.constant 0 : index
    %c0_2 = arith.constant 0 : index
    %1 = vector.load %arg2[%c0_1, %c0_2] : memref<8x128xi32, #tpu.memory_space<vmem>>, vector<8x128xi32>
    %2 = arith.addi %0, %1 : vector<8x128xi32>
    %c0_3 = arith.constant 0 : index
    %c0_4 = arith.constant 0 : index
    %3 = vector.load %arg3[%c0_3, %c0_4] : memref<8x128xi32, #tpu.memory_space<vmem>>, vector<8x128xi32>
    tpu.vector_store %arg3[%c0_3, %c0_4], %2 {strides = array<i32>} : memref<8x128xi32, #tpu.memory_space<vmem>>, vector<8x128xi32>,
    %4 = arith.addi %0, %0 : vector<8x128xi32>
    %c0_5 = arith.constant 0 : index
    %c0_6 = arith.constant 0 : index
    %5 = vector.load %arg4[%c0_5, %c0_6] : memref<8x128xi32, #tpu.memory_space<vmem>>, vector<8x128xi32>
    tpu.vector_store %arg4[%c0_5, %c0_6], %4 {strides = array<i32>} : memref<8x128xi32, #tpu.memory_space<vmem>>, vector<8x128xi32>,
    return
  }
  func.func @transform_0(%arg0: i32) -> (i32, i32) {
    %c0_i32 = arith.constant 0 : i32
    %c0_i32_0 = arith.constant 0 : i32
    return %arg0, %c0_i32 : i32, i32
  }
  func.func @transform_1(%arg0: i32) -> (i32, i32) {
    %c0_i32 = arith.constant 0 : i32
    %c0_i32_0 = arith.constant 0 : i32
    return %arg0, %c0_i32 : i32, i32
  }
  func.func @transform_2(%arg0: i32) -> (i32, i32) {
    %c0_i32 = arith.constant 0 : i32
    %c0_i32_0 = arith.constant 0 : i32
    return %arg0, %c0_i32 : i32, i32
  }
  func.func @transform_3(%arg0: i32) -> (i32, i32) {
    %c0_i32 = arith.constant 0 : i32
    %c0_i32_0 = arith.constant 0 : i32
    return %arg0, %c0_i32 : i32, i32
  }
}

</mosaic_0001>

<llo_original>
// kernel: tpu_custom_call.1
$region0: #{tpu_custom_call.1}
  #allocation0 [shape = 'u32[]', space=smem, size = 0x4, offset = 0x4, fixed_abs, tag = 'smem constant byte address 0x4 - core index']
  #allocation1 [shape = 'u32[144,128]{1,0:T(1,128)}', space=vmem, size = 0x12000, scoped, tag = 'internal scratch']
  %s0 = inlined_call_operand.hbm [shape: s32[8,128], index: 0, kind: input, shape index: {}]
  %s1 = inlined_call_operand.hbm [shape: s32[8,128], index: 1, kind: input, shape index: {}]
  %s2 = inlined_call_operand.hbm [shape: s32[8,128], index: 2, kind: output, shape index: {0}]
  %s3 = inlined_call_operand.hbm [shape: s32[8,128], index: 3, kind: output, shape index: {1}]
  %4 = xla_tuple %s2, %s3
  %s5 = sld [smem:[#allocation0]]
  $region34: #{tpu_custom_call.1} parent=0
    _
  %s7 = ssub.s32 1, %s5
  %s8 = scalar_select 0, %s7, %s5
  $region1: #{tpu_custom_call.1} parent=0
    #allocation2 [shape = 'u8[4096]{0}', space=vmem, size = 0x1000, scoped, tag = 'input window, operand 0, single buffered']
    #allocation3 [shape = 's32[1]{0}', space=sflag, size = 0x4, scoped, tag = 'scoped memory for tpu_custom_call.1']
    #allocation4 [shape = 's32[1]{0}', space=sflag, size = 0x4, scoped, tag = 'scoped memory for tpu_custom_call.1']
    #allocation5 [shape = 'u8[4096]{0}', space=vmem, size = 0x1000, scoped, tag = 'input window, operand 1, single buffered']
    #allocation6 [shape = 's32[1]{0}', space=sflag, size = 0x4, scoped, tag = 'scoped memory for tpu_custom_call.1']
    #allocation7 [shape = 'u8[4096]{0}', space=vmem, size = 0x1000, scoped, tag = 'output window, operand 0, single buffered']
    #allocation8 [shape = 'u8[4096]{0}', space=vmem, size = 0x1000, scoped, tag = 'output window, operand 1, single buffered']
    #allocation9 [shape = 's32[1]{0}', space=sflag, size = 0x4, scoped, tag = 'scoped memory for tpu_custom_call.1']
    %9 = vsyncpa [#allocation3], 0
    %10 = vsyncpa [#allocation6], 0
    %11 = vsyncpa [#allocation4], 0
    %12 = vsyncpa [#allocation9], 0
    // Predicated region
    $region2: #{tpu_custom_call.1} parent=1 // pred_check
      _
    $region3: #{tpu_custom_call.1} parent=1 // pred_check_branch
      %14 = sbr.rel (0) target = $region5
    $region4: #{tpu_custom_call.1} parent=1 // pred_region
      %s16 = ssub.s32 128, 128
      %17 = vsyncadd [#allocation3], %s16
      %s19 = sshll.u32 [#allocation2], 4
      %s20 = int_to_ptr.vmem [resolvable:$true] %s19
      %22 = dma.hbm_to_vmem [thread:$0]  %s0, 128, %s20, [#allocation3]
    $region5: #{tpu_custom_call.1} parent=1 // pred_fallthru
      _
    // Predicated region
    $region6: #{tpu_custom_call.1} parent=1 // pred_check
      _
    $region7: #{tpu_custom_call.1} parent=1 // pred_check_branch
      %24 = sbr.rel (0) target = $region9
    $region8: #{tpu_custom_call.1} parent=1 // pred_region
      %s26 = ssub.s32 128, 128
      %27 = vsyncadd [#allocation6], %s26
      %s29 = sshll.u32 [#allocation5], 4
      %s30 = int_to_ptr.vmem [resolvable:$true] %s29
      %32 = dma.hbm_to_vmem [thread:$0]  %s1, 128, %s30, [#allocation6]
    $region9: #{tpu_custom_call.1} parent=1 // pred_fallthru
      _
    // Predicated region
    $region10: #{tpu_custom_call.1} parent=1 // pred_check
      _
    $region11: #{tpu_custom_call.1} parent=1 // pred_check_branch
      %34 = sbr.rel (0) target = $region13
    $region12: #{tpu_custom_call.1} parent=1 // pred_region
      %35 = dma.done [#allocation3], 128
    $region13: #{tpu_custom_call.1} parent=1 // pred_fallthru
      _
    // Predicated region
    $region14: #{tpu_custom_call.1} parent=1 // pred_check
      _
    $region15: #{tpu_custom_call.1} parent=1 // pred_check_branch
      %37 = sbr.rel (0) target = $region17
    $region16: #{tpu_custom_call.1} parent=1 // pred_region
      %38 = dma.done [#allocation6], 128
    $region17: #{tpu_custom_call.1} parent=1 // pred_fallthru
      _
    %v39 = vld [vmem:[#allocation2] sm:$0xff]
    %v40 = vld [vmem:[#allocation5] sm:$0xff]
    %v41 = vadd.s32 %v39, %v40
    %42 = vst [vmem:[#allocation7] sm:$0xff] %v41
    %v43 = vadd.s32 %v39, %v39
    %44 = vst [vmem:[#allocation8] sm:$0xff] %v43
    // Predicated region
    $region18: #{tpu_custom_call.1} parent=1 // pred_check
      _
    $region19: #{tpu_custom_call.1} parent=1 // pred_check_branch
      %46 = sbr.rel (0) target = $region21
    $region20: #{tpu_custom_call.1} parent=1 // pred_region
      %s48 = ssub.s32 128, 128
      %49 = vsyncadd [#allocation4], %s48
      %s51 = sshll.u32 [#allocation7], 4
      %s52 = int_to_ptr.vmem [resolvable:$true] %s51
      %54 = dma.vmem_to_hbm [thread:$0]  %s52, 128, %s2, [#allocation4]
    $region21: #{tpu_custom_call.1} parent=1 // pred_fallthru
      _
    // Predicated region
    $region22: #{tpu_custom_call.1} parent=1 // pred_check
      _
    $region23: #{tpu_custom_call.1} parent=1 // pred_check_branch
      %56 = sbr.rel (0) target = $region25
    $region24: #{tpu_custom_call.1} parent=1 // pred_region
      %s58 = ssub.s32 128, 128
      %59 = vsyncadd [#allocation9], %s58
      %s61 = sshll.u32 [#allocation8], 4
      %s62 = int_to_ptr.vmem [resolvable:$true] %s61
      %64 = dma.vmem_to_hbm [thread:$0]  %s62, 128, %s3, [#allocation9]
    $region25: #{tpu_custom_call.1} parent=1 // pred_fallthru
      _
    // Predicated region
    $region26: #{tpu_custom_call.1} parent=1 // pred_check
      _
    $region27: #{tpu_custom_call.1} parent=1 // pred_check_branch
      %66 = sbr.rel (0) target = $region29
    $region28: #{tpu_custom_call.1} parent=1 // pred_region
      %67 = dma.done [#allocation4], 128
    $region29: #{tpu_custom_call.1} parent=1 // pred_fallthru
      _
    // Predicated region
    $region30: #{tpu_custom_call.1} parent=1 // pred_check
      _
    $region31: #{tpu_custom_call.1} parent=1 // pred_check_branch
      %69 = sbr.rel (0) target = $region33
    $region32: #{tpu_custom_call.1} parent=1 // pred_region
      %70 = dma.done [#allocation9], 128
    $region33: #{tpu_custom_call.1} parent=1 // pred_fallthru
      _
    %71 = vsyncpa [#allocation3], 1
    %72 = vsyncpa [#allocation6], 1
    %73 = vsyncpa [#allocation4], 1
    %74 = vsyncpa [#allocation9], 1

</llo_original>
